<compile_context>
chip_gen: v6e
topology: v6e:2x2x1
jax: 0.10.0
libtpu: 0.0.40
codegen_flags: <defaults>
</compile_context>

<pallas_src>
import functools

import jax
import jax.numpy as jnp
from jax.experimental import pallas as pl
from jax.experimental.pallas import tpu as pltpu

K = 3                       # conv kernel size
DILATIONS = (1, 3)          # ResBlock2 default dilation=(1, 3)


def get_padding(kernel_size, dilation):
    return (kernel_size * dilation - dilation) // 2


PAD1 = get_padding(K, DILATIONS[0])    # 1
PAD2 = get_padding(K, DILATIONS[1])    # 3
HALO = PAD1 + PAD2                     # 4  (cascaded receptive field per side)


def _cdiv(a, b):
    return -(-a // b)


def _device_kind():
    try:
        return jax.devices()[0].device_kind.lower()
    except Exception:
        return ""


def _choose_tile_t(T, B, max_tile_t):
    """Pick the time tile.  Multi-tile TT is a multiple of 128 (lane-dense)."""
    mt = max(128, (max_tile_t // 128) * 128)
    if T <= mt and (B >= 2 or T < 256):
        return T, 1                       # single full-width tile
    tt = mt
    if B == 1:                            # keep >= 2 grid points (2 TCs on v7x)
        tt = min(tt, 128 * _cdiv(_cdiv(T, 2), 128))
    return tt, _cdiv(T, tt)


def _resblock2_kernel(x_ref, h_ref, w_ref, b_ref, a_ref, ia_ref, o_ref, *,
                      t_valid, fuse_taps, snake_dtype, conv_dtype):
    """One (batch, time-tile) grid step.

    x_ref : (1, C, TT)         input tile, native dtype
    h_ref : (1, 1, C, 2*HALO)  left/right halo columns of this tile, native dtype
    w_ref : (2, C, K*C) fused  OR  (2, K, C, C) per-tap packed conv weights
    b_ref : (2, C, 1) f32 bias;  a_ref / ia_ref : (2, C, 1) alpha / 1/(alpha+1e-9)
    o_ref : (1, C, TT)         output tile
    """
    C, TT = x_ref.shape[1], x_ref.shape[2]
    WIN = TT + 2 * HALO            # layer-1 input window
    W1 = TT + 2 * PAD2             # layer-1 output window needed by layer 2
    tile = pl.program_id(1)
    start = tile * TT - HALO       # global time index of window column 0

    # Haloed window in native dtype, upcast in VMEM, then zero everything
    # outside the true [0, T) sequence (edge-tile halos hold clipped data and
    # the ragged last tile's overhang holds undefined data -> both masked).
    x0 = jnp.concatenate(
        [h_ref[0, 0, :, :HALO], x_ref[0], h_ref[0, 0, :, HALO:]], axis=-1)
    pos = jax.lax.broadcasted_iota(jnp.int32, (1, WIN), 1) + start
    x0 = jnp.where((pos >= 0) & (pos < t_valid), x0.astype(jnp.float32), 0.0)

    def snake(v, l):
        # Snake1d: v + (alpha + 1e-9)^-1 * sin(alpha*v)^2  (inverse precomputed).
        a, ia = a_ref[l], ia_ref[l]                      # (C, 1) in snake_dtype
        vs = v.astype(snake_dtype)
        s = jnp.sin(a * vs)
        return (vs + ia * (s * s)).astype(conv_dtype)

    def conv(xt, l, dil, width):
        # 3-tap dilated conv as MXU matmul(s) with f32 accumulation.
        if fuse_taps:          # small C: (C, 3C) @ (3C, W) fills the MXU depth
            xcat = jnp.concatenate(
                [xt[:, k * dil:k * dil + width] for k in range(K)], axis=0)
            return jnp.dot(w_ref[l], xcat, preferred_element_type=jnp.float32)
        # large C: three accumulating matmuls, no (3C, W) staging copy
        y = jnp.dot(w_ref[l, 0], xt[:, :width],
                    preferred_element_type=jnp.float32)
        for k in range(1, K):
            y = y + jnp.dot(w_ref[l, k], xt[:, k * dil:k * dil + width],
                            preferred_element_type=jnp.float32)
        return y

    # ---- layer 1: Snake + conv(d=1, pad=1) + residual, over the W1 window ----
    x1 = conv(snake(x0, 0), 0, DILATIONS[0], W1) + b_ref[0] \
        + x0[:, PAD1:PAD1 + W1]
    # Layer 2's conv zero-pads layer-1's *output* outside the true sequence.
    # (Kept unconditional: ~2 selects/vreg vs the dominant sin cost; pl.when
    #  can only gate ref writes, not rewrite SSA values.)
    pos1 = pos[:, PAD1:PAD1 + W1]
    x1 = jnp.where((pos1 >= 0) & (pos1 < t_valid), x1, 0.0)

    # ---- layer 2: Snake + conv(d=3, pad=3) + residual, over the central TT ----
    y2 = conv(snake(x1, 1), 1, DILATIONS[1], TT)
    o_ref[0] = (y2 + b_ref[1] + x1[:, PAD2:PAD2 + TT]).astype(o_ref.dtype)


def _resblock2_impl(x_bct, weights, biases, alphas, max_tile_t, snake_dtype,
                    conv_dtype, fuse_taps, vmem_limit_bytes):
    B, C, T = x_bct.shape
    TT, n_tiles = _choose_tile_t(T, B, max_tile_t)

    # Per-tile halo columns gathered directly from x (native dtype, 2*HALO
    # columns per tile).  Out-of-range indices are clipped here and masked
    # against [0, T) in-kernel -- no full-tensor pad, no per-tile zero concat.
    starts = jnp.arange(n_tiles, dtype=jnp.int32) * TT
    offs = jnp.arange(HALO, dtype=jnp.int32)
    idx = jnp.concatenate([starts[:, None] - HALO + offs[None, :],
                           starts[:, None] + TT + offs[None, :]], axis=1)
    idx = jnp.clip(idx, 0, T - 1).reshape(-1)
    halos = jnp.take(x_bct, idx, axis=2).reshape(B, C, n_tiles, 2 * HALO)
    halos = jnp.transpose(halos, (2, 0, 1, 3))        # (n_tiles, B, C, 2*HALO)

    # Pack conv weights for the chosen matmul form.
    if fuse_taps:   # Wf[l, o, k*C + i] = w[l, o, i, k]
        wp = jnp.transpose(weights, (0, 1, 3, 2)).reshape(2, C, K * C)
        w_spec = pl.BlockSpec((2, C, K * C), lambda b, i: (0, 0, 0))
    else:           # Wt[l, k, o, i] = w[l, o, i, k]
        wp = jnp.transpose(weights, (0, 3, 1, 2))
        w_spec = pl.BlockSpec((2, K, C, C), lambda b, i: (0, 0, 0, 0))
    wp = wp.astype(conv_dtype)
    b_pack = biases.reshape(2, C, 1).astype(jnp.float32)
    a_pack = alphas.reshape(2, C, 1).astype(snake_dtype)
    ia_pack = (1.0 / (alphas.astype(jnp.float32) + 1e-9)
               ).reshape(2, C, 1).astype(snake_dtype)

    kernel = functools.partial(
        _resblock2_kernel, t_valid=T, fuse_taps=fuse_taps,
        snake_dtype=snake_dtype, conv_dtype=conv_dtype)

    # TODO(synk): single-buffer the grid-invariant weight/bias/alpha blocks
    # (pipeline_mode=pl.Buffered(1)) once buffer_count=1 is supported, to free
    # VMEM for larger time tiles on v7x (64 MiB / TC).
    # TODO(synk): for C < 8 fold batch / multiple time tiles into the matmul M
    # dim to avoid sublane / MXU-row waste (unusual for this generator).
    return pl.pallas_call(
        kernel,
        out_shape=jax.ShapeDtypeStruct((B, C, T), x_bct.dtype),
        grid=(B, n_tiles),
        in_specs=[
            pl.BlockSpec((1, C, TT), lambda b, i: (b, 0, i)),
            pl.BlockSpec((1, 1, C, 2 * HALO), lambda b, i: (i, b, 0, 0)),
            w_spec,
            pl.BlockSpec((2, C, 1), lambda b, i: (0, 0, 0)),
            pl.BlockSpec((2, C, 1), lambda b, i: (0, 0, 0)),
            pl.BlockSpec((2, C, 1), lambda b, i: (0, 0, 0)),
        ],
        out_specs=pl.BlockSpec((1, C, TT), lambda b, i: (b, 0, i)),
        compiler_params=pltpu.CompilerParams(
            dimension_semantics=("parallel", "parallel"),
            vmem_limit_bytes=vmem_limit_bytes),
    )(x_bct, halos, wp, b_pack, a_pack, ia_pack)


def resblock2_pallas(x_bct, weights, biases, alphas, *, max_tile_t=1024,
                     snake_dtype=None, conv_dtype=jnp.bfloat16, fuse_taps=None,
                     vmem_limit_bytes=None):
    """x_bct: (B, C, T) like the PyTorch Conv1d input (streamed in its native
    dtype).  weights: (2, C_out, C_in, K) with weight_norm folded.
    biases/alphas: (2, C).  Returns (B, C, T) in x_bct.dtype."""
    C = x_bct.shape[1]
    kind = _device_kind()
    if snake_dtype is None:
        # bf16 VALU exists on v6e/v7x; v5e and older keep Snake math in f32.
        snake_dtype = jnp.bfloat16 if ("v6" in kind or "v7" in kind) else jnp.float32
    if fuse_taps is None:
        mxu_depth = 128 if any(v in kind for v in ("v2", "v3", "v4", "v5")) else 256
        fuse_taps = C < mxu_depth
    if vmem_limit_bytes is None:
        # 128 MiB VMEM on v5e/v6e, 64 MiB per TC on v7x (leave headroom).
        vmem_limit_bytes = (96 if ("v5" in kind or "v6" in kind) else 48) * 1024 * 1024

    try:
        return _resblock2_impl(x_bct, weights, biases, alphas, max_tile_t,
                               snake_dtype, conv_dtype, fuse_taps,
                               vmem_limit_bytes)
    except Exception:
        if snake_dtype == jnp.float32:
            raise
        # Fall back to f32 Snake math if bf16 transcendental lowering is
        # unavailable on this chip / compiler version.
        return _resblock2_impl(x_bct, weights, biases, alphas, max_tile_t,
                               jnp.float32, conv_dtype, fuse_taps,
                               vmem_limit_bytes)


def resblock2_reference(x_bct, weights, biases, alphas):
    """Pure-JAX reference (lax.conv_general_dilated), same math as PyTorch."""
    x = x_bct.astype(jnp.float32)
    for l, d in enumerate(DILATIONS):
        pad = get_padding(K, d)
        alpha = alphas[l].reshape(1, -1, 1).astype(jnp.float32)
        xt = x + (1.0 / (alpha + 1e-9)) * jnp.sin(alpha * x) ** 2
        y = jax.lax.conv_general_dilated(
            xt, weights[l].astype(jnp.float32), window_strides=(1,),
            padding=[(pad, pad)], rhs_dilation=(d,),
            dimension_numbers=("NCH", "OIH", "NCH"))
        x = y + biases[l].reshape(1, -1, 1) + x
    return x


if __name__ == "__main__":
    key = jax.random.PRNGKey(0)
    k1, k2, k3, k4, k5, k6 = jax.random.split(key, 6)

    def check(x, w, b, a, atol, **kw):
        out = jax.block_until_ready(resblock2_pallas(x, w, b, a, **kw))
        ref = resblock2_reference(x, w, b, a)
        assert out.shape == x.shape and out.dtype == x.dtype
        out32 = out.astype(jnp.float32)
        err = jnp.max(jnp.abs(out32 - ref))
        assert jnp.allclose(out32, ref, rtol=2e-2, atol=atol), f"max abs err {err}"

    # 1) module-scale shapes: single tile, fused 3-tap matmul path.
    B, C, T = 2, 4, 16
    w = jax.random.normal(k1, (2, C, C, K), jnp.float32) * 0.01   # init_weights N(0, 0.01)
    b = jax.random.normal(k2, (2, C), jnp.float32) * 0.01
    a = jnp.ones((2, C), jnp.float32)                             # Snake1d alpha init = 1
    x = jax.random.normal(k3, (B, C, T), jnp.float32)
    check(x, w, b, a, atol=2e-3)

    # 2) multi-tile + ragged tail: exercises halo gather and boundary masking.
    x2 = jax.random.normal(k4, (B, C, 333), jnp.float32)
    check(x2, w, b, a, atol=2e-3, max_tile_t=128)

    # 3) native-bf16 streaming, per-tap accumulating matmuls, B==1 tile split.
    C3 = 128
    w3 = jax.random.normal(k5, (2, C3, C3, K), jnp.float32) * 0.01
    b3 = jnp.zeros((2, C3), jnp.float32)
    a3 = jnp.ones((2, C3), jnp.float32)
    x3 = jax.random.normal(k6, (1, C3, 384), jnp.bfloat16)
    check(x3, w3, b3, a3, atol=1e-2, fuse_taps=False)

    print("KERNEL_OK")
</pallas_src>

<mosaic_0001>
module attributes {stable_mosaic.version = 11 : i64} {
  func.func @_resblock2_kernel(%arg0: i32, %arg1: i32, %arg2: memref<1x4x16xf32, #tpu.memory_space<vmem>>, %arg3: memref<1x1x4x8xf32, #tpu.memory_space<vmem>>, %arg4: memref<2x4x12xbf16, #tpu.memory_space<vmem>>, %arg5: memref<2x4x1xf32, #tpu.memory_space<vmem>>, %arg6: memref<2x4x1xf32, #tpu.memory_space<vmem>>, %arg7: memref<2x4x1xf32, #tpu.memory_space<vmem>>, %arg8: memref<1x4x16xf32, #tpu.memory_space<vmem>>) attributes {dimension_semantics = [#tpu.dimension_semantics<parallel>, #tpu.dimension_semantics<parallel>], iteration_bounds = array<i64: 2, 1>, scalar_prefetch = 0 : i64, scratch_operands = 0 : i64, tpu.core_type = #tpu.core_type<tc>, window_params = [{transform_indices = @transform_0, window_bounds = array<i64: 1, 4, 16>}, {transform_indices = @transform_1, window_bounds = array<i64: 1, 1, 4, 8>}, {pipeline_mode = #tpu.pipeline_mode<synchronous>, transform_indices = @transform_2, window_bounds = array<i64: 2, 4, 12>}, {pipeline_mode = #tpu.pipeline_mode<synchronous>, transform_indices = @transform_3, window_bounds = array<i64: 2, 4, 1>}, {pipeline_mode = #tpu.pipeline_mode<synchronous>, transform_indices = @transform_4, window_bounds = array<i64: 2, 4, 1>}, {pipeline_mode = #tpu.pipeline_mode<synchronous>, transform_indices = @transform_5, window_bounds = array<i64: 2, 4, 1>}, {transform_indices = @transform_6, window_bounds = array<i64: 1, 4, 16>}]} {
    %c16_i32 = arith.constant 16 : i32
    %0 = arith.muli %arg1, %c16_i32 : i32
    %c4_i32 = arith.constant 4 : i32
    %1 = arith.subi %0, %c4_i32 : i32
    %c0 = arith.constant 0 : index
    %c0_0 = arith.constant 0 : index
    %c0_1 = arith.constant 0 : index
    %c0_2 = arith.constant 0 : index
    %2 = vector.load %arg3[%c0, %c0_0, %c0_1, %c0_2] : memref<1x1x4x8xf32, #tpu.memory_space<vmem>>, vector<1x1x4x4xf32>
    %3 = vector.shape_cast %2 : vector<1x1x4x4xf32> to vector<4x4xf32>
    %c0_3 = arith.constant 0 : index
    %c0_4 = arith.constant 0 : index
    %c0_5 = arith.constant 0 : index
    %4 = vector.load %arg2[%c0_3, %c0_4, %c0_5] : memref<1x4x16xf32, #tpu.memory_space<vmem>>, vector<1x4x16xf32>
    %5 = vector.shape_cast %4 : vector<1x4x16xf32> to vector<4x16xf32>
    %c0_6 = arith.constant 0 : index
    %c0_7 = arith.constant 0 : index
    %c0_8 = arith.constant 0 : index
    %c4 = arith.constant 4 : index
    %6 = vector.load %arg3[%c0_6, %c0_7, %c0_8, %c4] : memref<1x1x4x8xf32, #tpu.memory_space<vmem>>, vector<1x1x4x4xf32>
    %7 = vector.shape_cast %6 : vector<1x1x4x4xf32> to vector<4x4xf32>
    %8 = tpu.concatenate %3, %5, %7 in 1 : vector<4x4xf32>, vector<4x16xf32>, vector<4x4xf32> -> vector<4x24xf32>
    %9 = tpu.iota {dimensions = array<i32: 1>} : vector<1x24xi32>
    %10 = vector.broadcast %1 : i32 to vector<1x24xi32>
    %11 = arith.addi %9, %10 : vector<1x24xi32>
    %c0_i32 = arith.constant 0 : i32
    %12 = vector.broadcast %c0_i32 : i32 to vector<1x24xi32>
    %13 = arith.cmpi sge, %11, %12 : vector<1x24xi32>
    %c16_i32_9 = arith.constant 16 : i32
    %14 = vector.broadcast %c16_i32_9 : i32 to vector<1x24xi32>
    %15 = arith.cmpi slt, %11, %14 : vector<1x24xi32>
    %16 = arith.andi %13, %15 : vector<1x24xi1>
    %cst = arith.constant 0.000000e+00 : f32
    %17 = vector.shape_cast %16 : vector<1x24xi1> to vector<1x24xi1>
    %18 = vector.broadcast %17 : vector<1x24xi1> to vector<4x24xi1>
    %19 = vector.broadcast %cst : f32 to vector<4x24xf32>
    %20 = arith.select %18, %8, %19 : vector<4x24xi1>, vector<4x24xf32>
    %c0_10 = arith.constant 0 : index
    %c0_11 = arith.constant 0 : index
    %c0_12 = arith.constant 0 : index
    %21 = vector.load %arg6[%c0_10, %c0_11, %c0_12] : memref<2x4x1xf32, #tpu.memory_space<vmem>>, vector<1x4x1xf32>
    %22 = vector.shape_cast %21 : vector<1x4x1xf32> to vector<4x1xf32>
    %c0_13 = arith.constant 0 : index
    %c0_14 = arith.constant 0 : index
    %c0_15 = arith.constant 0 : index
    %23 = vector.load %arg7[%c0_13, %c0_14, %c0_15] : memref<2x4x1xf32, #tpu.memory_space<vmem>>, vector<1x4x1xf32>
    %24 = vector.shape_cast %23 : vector<1x4x1xf32> to vector<4x1xf32>
    %25 = vector.broadcast %22 : vector<4x1xf32> to vector<4x24xf32>
    %26 = arith.mulf %25, %20 : vector<4x24xf32>
    %27 = math.sin %26 : vector<4x24xf32>
    %28 = arith.mulf %27, %27 : vector<4x24xf32>
    %29 = vector.broadcast %24 : vector<4x1xf32> to vector<4x24xf32>
    %30 = arith.mulf %29, %28 : vector<4x24xf32>
    %31 = arith.addf %20, %30 : vector<4x24xf32>
    %32 = arith.truncf %31 : vector<4x24xf32> to vector<4x24xbf16>
    %33 = vector.extract_strided_slice %32 {offsets = [0, 0], sizes = [4, 22], strides = [1, 1]} : vector<4x24xbf16> to vector<4x22xbf16>
    %34 = vector.extract_strided_slice %32 {offsets = [0, 1], sizes = [4, 22], strides = [1, 1]} : vector<4x24xbf16> to vector<4x22xbf16>
    %35 = vector.extract_strided_slice %32 {offsets = [0, 2], sizes = [4, 22], strides = [1, 1]} : vector<4x24xbf16> to vector<4x22xbf16>
    %36 = tpu.concatenate %33, %34, %35 in 0 : vector<4x22xbf16>, vector<4x22xbf16>, vector<4x22xbf16> -> vector<12x22xbf16>
    %c0_16 = arith.constant 0 : index
    %c0_17 = arith.constant 0 : index
    %c0_18 = arith.constant 0 : index
    %37 = vector.load %arg4[%c0_16, %c0_17, %c0_18] : memref<2x4x12xbf16, #tpu.memory_space<vmem>>, vector<1x4x12xbf16>
    %38 = vector.shape_cast %37 : vector<1x4x12xbf16> to vector<4x12xbf16>
    %cst_19 = arith.constant dense<0.000000e+00> : vector<4x22xf32>
    %39 = tpu.matmul %38, %36, %cst_19 {dimension_numbers = #tpu.dot_dimension_numbers<[1], [0], [0], [1], [0, 0, 1, 1], [], []>} : vector<4x12xbf16>, vector<12x22xbf16>, vector<4x22xf32> -> vector<4x22xf32>
    %c0_20 = arith.constant 0 : index
    %c0_21 = arith.constant 0 : index
    %c0_22 = arith.constant 0 : index
    %40 = vector.load %arg5[%c0_20, %c0_21, %c0_22] : memref<2x4x1xf32, #tpu.memory_space<vmem>>, vector<1x4x1xf32>
    %41 = vector.shape_cast %40 : vector<1x4x1xf32> to vector<4x1xf32>
    %42 = vector.broadcast %41 : vector<4x1xf32> to vector<4x22xf32>
    %43 = arith.addf %39, %42 : vector<4x22xf32>
    %44 = vector.extract_strided_slice %20 {offsets = [0, 1], sizes = [4, 22], strides = [1, 1]} : vector<4x24xf32> to vector<4x22xf32>
    %45 = arith.addf %43, %44 : vector<4x22xf32>
    %46 = vector.extract_strided_slice %11 {offsets = [0, 1], sizes = [1, 22], strides = [1, 1]} : vector<1x24xi32> to vector<1x22xi32>
    %c0_i32_23 = arith.constant 0 : i32
    %47 = vector.broadcast %c0_i32_23 : i32 to vector<1x22xi32>
    %48 = arith.cmpi sge, %46, %47 : vector<1x22xi32>
    %c16_i32_24 = arith.constant 16 : i32
    %49 = vector.broadcast %c16_i32_24 : i32 to vector<1x22xi32>
    %50 = arith.cmpi slt, %46, %49 : vector<1x22xi32>
    %51 = arith.andi %48, %50 : vector<1x22xi1>
    %cst_25 = arith.constant 0.000000e+00 : f32
    %52 = vector.shape_cast %51 : vector<1x22xi1> to vector<1x22xi1>
    %53 = vector.broadcast %52 : vector<1x22xi1> to vector<4x22xi1>
    %54 = vector.broadcast %cst_25 : f32 to vector<4x22xf32>
    %55 = arith.select %53, %45, %54 : vector<4x22xi1>, vector<4x22xf32>
    %c1 = arith.constant 1 : index
    %c0_26 = arith.constant 0 : index
    %c0_27 = arith.constant 0 : index
    %56 = vector.load %arg6[%c1, %c0_26, %c0_27] : memref<2x4x1xf32, #tpu.memory_space<vmem>>, vector<1x4x1xf32>
    %57 = vector.shape_cast %56 : vector<1x4x1xf32> to vector<4x1xf32>
    %c1_28 = arith.constant 1 : index
    %c0_29 = arith.constant 0 : index
    %c0_30 = arith.constant 0 : index
    %58 = vector.load %arg7[%c1_28, %c0_29, %c0_30] : memref<2x4x1xf32, #tpu.memory_space<vmem>>, vector<1x4x1xf32>
    %59 = vector.shape_cast %58 : vector<1x4x1xf32> to vector<4x1xf32>
    %60 = vector.broadcast %57 : vector<4x1xf32> to vector<4x22xf32>
    %61 = arith.mulf %60, %55 : vector<4x22xf32>
    %62 = math.sin %61 : vector<4x22xf32>
    %63 = arith.mulf %62, %62 : vector<4x22xf32>
    %64 = vector.broadcast %59 : vector<4x1xf32> to vector<4x22xf32>
    %65 = arith.mulf %64, %63 : vector<4x22xf32>
    %66 = arith.addf %55, %65 : vector<4x22xf32>
    %67 = arith.truncf %66 : vector<4x22xf32> to vector<4x22xbf16>
    %68 = vector.extract_strided_slice %67 {offsets = [0, 0], sizes = [4, 16], strides = [1, 1]} : vector<4x22xbf16> to vector<4x16xbf16>
    %69 = vector.extract_strided_slice %67 {offsets = [0, 3], sizes = [4, 16], strides = [1, 1]} : vector<4x22xbf16> to vector<4x16xbf16>
    %70 = vector.extract_strided_slice %67 {offsets = [0, 6], sizes = [4, 16], strides = [1, 1]} : vector<4x22xbf16> to vector<4x16xbf16>
    %71 = tpu.concatenate %68, %69, %70 in 0 : vector<4x16xbf16>, vector<4x16xbf16>, vector<4x16xbf16> -> vector<12x16xbf16>
    %c1_31 = arith.constant 1 : index
    %c0_32 = arith.constant 0 : index
    %c0_33 = arith.constant 0 : index
    %72 = vector.load %arg4[%c1_31, %c0_32, %c0_33] : memref<2x4x12xbf16, #tpu.memory_space<vmem>>, vector<1x4x12xbf16>
    %73 = vector.shape_cast %72 : vector<1x4x12xbf16> to vector<4x12xbf16>
    %cst_34 = arith.constant dense<0.000000e+00> : vector<4x16xf32>
    %74 = tpu.matmul %73, %71, %cst_34 {dimension_numbers = #tpu.dot_dimension_numbers<[1], [0], [0], [1], [0, 0, 1, 1], [], []>} : vector<4x12xbf16>, vector<12x16xbf16>, vector<4x16xf32> -> vector<4x16xf32>
    %c1_35 = arith.constant 1 : index
    %c0_36 = arith.constant 0 : index
    %c0_37 = arith.constant 0 : index
    %75 = vector.load %arg5[%c1_35, %c0_36, %c0_37] : memref<2x4x1xf32, #tpu.memory_space<vmem>>, vector<1x4x1xf32>
    %76 = vector.shape_cast %75 : vector<1x4x1xf32> to vector<4x1xf32>
    %77 = vector.broadcast %76 : vector<4x1xf32> to vector<4x16xf32>
    %78 = arith.addf %74, %77 : vector<4x16xf32>
    %79 = vector.extract_strided_slice %55 {offsets = [0, 3], sizes = [4, 16], strides = [1, 1]} : vector<4x22xf32> to vector<4x16xf32>
    %80 = arith.addf %78, %79 : vector<4x16xf32>
    %c0_38 = arith.constant 0 : index
    %c0_39 = arith.constant 0 : index
    %c0_40 = arith.constant 0 : index
    %81 = vector.load %arg8[%c0_38, %c0_39, %c0_40] : memref<1x4x16xf32, #tpu.memory_space<vmem>>, vector<1x4x16xf32>
    %82 = vector.shape_cast %81 : vector<1x4x16xf32> to vector<4x16xf32>
    %83 = vector.shape_cast %80 : vector<4x16xf32> to vector<1x4x16xf32>
    tpu.vector_store %arg8[%c0_38, %c0_39, %c0_40], %83 {strides = array<i32>} : memref<1x4x16xf32, #tpu.memory_space<vmem>>, vector<1x4x16xf32>,
    return
  }
  func.func @transform_0(%arg0: i32, %arg1: i32) -> (i32, i32, i32) {
    %c0_i32 = arith.constant 0 : i32
    %c0_i32_0 = arith.constant 0 : i32
    return %arg0, %c0_i32, %arg1 : i32, i32, i32
  }
  func.func @transform_1(%arg0: i32, %arg1: i32) -> (i32, i32, i32, i32) {
    %c0_i32 = arith.constant 0 : i32
    %c0_i32_0 = arith.constant 0 : i32
    %c0_i32_1 = arith.constant 0 : i32
    return %arg1, %arg0, %c0_i32, %c0_i32_0 : i32, i32, i32, i32
  }
  func.func @transform_2(%arg0: i32, %arg1: i32) -> (i32, i32, i32) {
    %c0_i32 = arith.constant 0 : i32
    %c0_i32_0 = arith.constant 0 : i32
    %c0_i32_1 = arith.constant 0 : i32
    %c0_i32_2 = arith.constant 0 : i32
    return %c0_i32, %c0_i32_0, %c0_i32_1 : i32, i32, i32
  }
  func.func @transform_3(%arg0: i32, %arg1: i32) -> (i32, i32, i32) {
    %c0_i32 = arith.constant 0 : i32
    %c0_i32_0 = arith.constant 0 : i32
    %c0_i32_1 = arith.constant 0 : i32
    %c0_i32_2 = arith.constant 0 : i32
    return %c0_i32, %c0_i32_0, %c0_i32_1 : i32, i32, i32
  }
  func.func @transform_4(%arg0: i32, %arg1: i32) -> (i32, i32, i32) {
    %c0_i32 = arith.constant 0 : i32
    %c0_i32_0 = arith.constant 0 : i32
    %c0_i32_1 = arith.constant 0 : i32
    %c0_i32_2 = arith.constant 0 : i32
    return %c0_i32, %c0_i32_0, %c0_i32_1 : i32, i32, i32
  }
  func.func @transform_5(%arg0: i32, %arg1: i32) -> (i32, i32, i32) {
    %c0_i32 = arith.constant 0 : i32
    %c0_i32_0 = arith.constant 0 : i32
    %c0_i32_1 = arith.constant 0 : i32
    %c0_i32_2 = arith.constant 0 : i32
    return %c0_i32, %c0_i32_0, %c0_i32_1 : i32, i32, i32
  }
  func.func @transform_6(%arg0: i32, %arg1: i32) -> (i32, i32, i32) {
    %c0_i32 = arith.constant 0 : i32
    %c0_i32_0 = arith.constant 0 : i32
    return %arg0, %c0_i32, %arg1 : i32, i32, i32
  }
}

</mosaic_0001>

<llo_original>
// kernel: tpu_custom_call.1
$region0: #{tpu_custom_call.1}
  #allocation0 [shape = 'u32[]', space=smem, size = 0x4, offset = 0x4, fixed_abs, tag = 'smem constant byte address 0x4 - core index']
  #allocation1 [shape = 'u32[144,128]{1,0:T(1,128)}', space=vmem, size = 0x12000, scoped, tag = 'internal scratch']
  %s0 = inlined_call_operand.vmem [shape: f32[2,4,16], index: 0, kind: input, shape index: {}]
  %s1 = inlined_call_operand.vmem [shape: f32[1,2,4,8], index: 1, kind: input, shape index: {}]
  %s2 = inlined_call_operand.vmem [shape: bf16[2,4,12], index: 2, kind: input, shape index: {}]
  %s3 = inlined_call_operand.vmem [shape: f32[2,4,1], index: 3, kind: input, shape index: {}]
  %s4 = inlined_call_operand.vmem [shape: f32[2,4,1], index: 4, kind: input, shape index: {}]
  %s5 = inlined_call_operand.vmem [shape: f32[2,4,1], index: 5, kind: input, shape index: {}]
  %s6 = inlined_call_operand.hbm [shape: f32[2,4,16], index: 6, kind: output, shape index: {}]
  %s7 = sld [smem:[#allocation0]]
  $region57: #{tpu_custom_call.1} parent=0
    _
  %s9 = ssub.s32 1, %s7
  %s10 = scalar_select 0, %s9, %s7
  $region1: #{tpu_custom_call.1} parent=0
    #allocation2 [shape = 'u8[4096]{0}', space=vmem, size = 0x1000, scoped, tag = 'output window, operand 0']
    #allocation3 [shape = 's32[2]{0}', space=sflag, size = 0x8, scoped, tag = 'scoped memory for tpu_custom_call.1']
    %11 = vsyncpa [#allocation3], 0
    %s12 = scalar_lea.sflag [#allocation3], 1
    %13 = vsyncpa %s12, 0
    loop: start=0, step=1, limit=4
    $region2: #{tpu_custom_call.1} parent=1 // loop_pre_header
      _
    $region3: #{tpu_custom_call.1} parent=1 // loop_header
      %s15 = sphi 0, %s19
      %p16 = scmp.ge.s32.totalorder %s15, 4
      %s22 = sphi 0, %s34
      %s23 = sphi 0, %s30
      %s24 = sphi 0, %s22
      %s25 = sphi 0, %s23
      %s26 = sphi 0, %s24
      %s27 = sphi 0, %s25
      %s39 = sphi 0, %s41
      %s42 = sphi 0, %s39
      %s43 = sphi 0, %s42
      %s59 = sphi 0, %s43
      %s67 = sphi 0, %s69
      %s70 = sphi 0, %s67
      %s71 = sphi 0, %s70
      %s87 = sphi 0, %s71
      %s91 = sphi 0, %s91
      %s93 = sphi 0, %s91
      %s94 = sphi 0, %s93
      %s108 = sphi 0, %s94
      %s112 = sphi 0, %s112
      %s114 = sphi 0, %s112
      %s115 = sphi 0, %s114
      %s129 = sphi 0, %s115
      %s133 = sphi 0, %s133
      %s135 = sphi 0, %s133
      %s136 = sphi 0, %s135
      %s150 = sphi 0, %s136
      %s154 = sphi 0, %s154
      %s156 = sphi 0, %s154
      %s157 = sphi 0, %s156
      %s171 = sphi 0, %s157
      %s179 = sphi 0, %s181
      %s182 = sphi 0, %s179
      %s183 = sphi 0, %s182
      %s199 = sphi 0, %s183
    $region4: #{tpu_custom_call.1} parent=1 // loop_header_branch
      %18 = sbr.rel (%p16) target = $region8
    $region5: #{tpu_custom_call.1} parent=1 // loop_body
      %s20 = ssub.s32 %s15, 1
      %s21 = ssub.s32 %s15, 2
      %s28 = sadd.s32 1, %s23
      %p29 = scmp.ge.s32.totalorder %s28, 1
      %s30 = scalar_select %p29, 0, %s28
      %s31 = sadd.s32 1, %s22
      %s32 = scalar_select %p29, %s31, %s22
      %p33 = scmp.ge.s32.totalorder %s32, 2
      %s34 = scalar_select %p33, 0, %s32
      %s35 = ssub.s32 %s22, %s34
      %s36 = ssub.s32 %s23, %s30
      %s37 = sor.u32 %s35, %s36
      %p38 = scmp.eq.s32.totalorder %s37, 0
      %s40 = sadd.s32 %s39, 1
      %s41 = scalar_select %p38, %s39, %s40
      %p44 = pneg %p38
      %p45 = scmp.eq.s32.totalorder %s15, 1
      %p46 = por %p44, %p45
      %p47 = scmp.ne.s32.totalorder %s39, %s42
      %p48 = scmp.eq.s32.totalorder %s15, 0
      %p49 = por %p47, %p48
      %p50 = scmp.ne.s32.totalorder %s39, %s42
      %p51 = scmp.eq.s32.totalorder %s20, 1
      %p52 = por %p50, %p51
      %p53 = scmp.ne.s32.totalorder %s42, %s43
      %p54 = scmp.eq.s32.totalorder %s20, 0
      %p55 = por %p53, %p54
      %p56 = scmp.ne.s32.totalorder %s42, %s43
      %p57 = scmp.eq.s32.totalorder %s21, 1
      %p58 = por %p56, %p57
      %p60 = scmp.ne.s32.totalorder %s43, %s59
      %p61 = scmp.eq.s32.totalorder %s21, 0
      %p62 = por %p60, %p61
      %s63 = ssub.s32 %s23, %s30
      %s64 = ssub.s32 %s22, %s34
      %s65 = sor.u32 %s63, %s64
      %p66 = scmp.eq.s32.totalorder %s65, 0
      %s68 = sadd.s32 %s67, 1
      %s69 = scalar_select %p66, %s67, %s68
      %p72 = pneg %p66
      %p73 = scmp.eq.s32.totalorder %s15, 1
      %p74 = por %p72, %p73
      %p75 = scmp.ne.s32.totalorder %s67, %s70
      %p76 = scmp.eq.s32.totalorder %s15, 0
      %p77 = por %p75, %p76
      %p78 = scmp.ne.s32.totalorder %s67, %s70
      %p79 = scmp.eq.s32.totalorder %s20, 1
      %p80 = por %p78, %p79
      %p81 = scmp.ne.s32.totalorder %s70, %s71
      %p82 = scmp.eq.s32.totalorder %s20, 0
      %p83 = por %p81, %p82
      %p84 = scmp.ne.s32.totalorder %s70, %s71
      %p85 = scmp.eq.s32.totalorder %s21, 1
      %p86 = por %p84, %p85
      %p88 = scmp.ne.s32.totalorder %s71, %s87
      %p89 = scmp.eq.s32.totalorder %s21, 0
      %p90 = por %p88, %p89
      %s92 = sadd.s32 %s91, 1
      %p95 = scmp.eq.s32.totalorder %s15, 1
      %p96 = scmp.ne.s32.totalorder %s91, %s93
      %p97 = scmp.eq.s32.totalorder %s15, 0
      %p98 = por %p96, %p97
      %p99 = scmp.ne.s32.totalorder %s91, %s93
      %p100 = scmp.eq.s32.totalorder %s20, 1
      %p101 = por %p99, %p100
      %p102 = scmp.ne.s32.totalorder %s93, %s94
      %p103 = scmp.eq.s32.totalorder %s20, 0
      %p104 = por %p102, %p103
      %p105 = scmp.ne.s32.totalorder %s93, %s94
      %p106 = scmp.eq.s32.totalorder %s21, 1
      %p107 = por %p105, %p106
      %p109 = scmp.ne.s32.totalorder %s94, %s108
      %p110 = scmp.eq.s32.totalorder %s21, 0
      %p111 = por %p109, %p110
      %s113 = sadd.s32 %s112, 1
      %p116 = scmp.eq.s32.totalorder %s15, 1
      %p117 = scmp.ne.s32.totalorder %s112, %s114
      %p118 = scmp.eq.s32.totalorder %s15, 0
      %p119 = por %p117, %p118
      %p120 = scmp.ne.s32.totalorder %s112, %s114
      %p121 = scmp.eq.s32.totalorder %s20, 1
      %p122 = por %p120, %p121
      %p123 = scmp.ne.s32.totalorder %s114, %s115
      %p124 = scmp.eq.s32.totalorder %s20, 0
      %p125 = por %p123, %p124
      %p126 = scmp.ne.s32.totalorder %s114, %s115
      %p127 = scmp.eq.s32.totalorder %s21, 1
      %p128 = por %p126, %p127
      %p130 = scmp.ne.s32.totalorder %s115, %s129
      %p131 = scmp.eq.s32.totalorder %s21, 0
      %p132 = por %p130, %p131
      %s134 = sadd.s32 %s133, 1
      %p137 = scmp.eq.s32.totalorder %s15, 1
      %p138 = scmp.ne.s32.totalorder %s133, %s135
      %p139 = scmp.eq.s32.totalorder %s15, 0
      %p140 = por %p138, %p139
      %p141 = scmp.ne.s32.totalorder %s133, %s135
      %p142 = scmp.eq.s32.totalorder %s20, 1
      %p143 = por %p141, %p142
      %p144 = scmp.ne.s32.totalorder %s135, %s136
      %p145 = scmp.eq.s32.totalorder %s20, 0
      %p146 = por %p144, %p145
      %p147 = scmp.ne.s32.totalorder %s135, %s136
      %p148 = scmp.eq.s32.totalorder %s21, 1
      %p149 = por %p147, %p148
      %p151 = scmp.ne.s32.totalorder %s136, %s150
      %p152 = scmp.eq.s32.totalorder %s21, 0
      %p153 = por %p151, %p152
      %s155 = sadd.s32 %s154, 1
      %p158 = scmp.eq.s32.totalorder %s15, 1
      %p159 = scmp.ne.s32.totalorder %s154, %s156
      %p160 = scmp.eq.s32.totalorder %s15, 0
      %p161 = por %p159, %p160
      %p162 = scmp.ne.s32.totalorder %s154, %s156
      %p163 = scmp.eq.s32.totalorder %s20, 1
      %p164 = por %p162, %p163
      %p165 = scmp.ne.s32.totalorder %s156, %s157
      %p166 = scmp.eq.s32.totalorder %s20, 0
      %p167 = por %p165, %p166
      %p168 = scmp.ne.s32.totalorder %s156, %s157
      %p169 = scmp.eq.s32.totalorder %s21, 1
      %p170 = por %p168, %p169
      %p172 = scmp.ne.s32.totalorder %s157, %s171
      %p173 = scmp.eq.s32.totalorder %s21, 0
      %p174 = por %p172, %p173
      %s175 = ssub.s32 %s22, %s34
      %s176 = ssub.s32 %s23, %s30
      %s177 = sor.u32 %s175, %s176
      %p178 = scmp.eq.s32.totalorder %s177, 0
      %s180 = sadd.s32 %s179, 1
      %s181 = scalar_select %p178, %s179, %s180
      %p184 = pneg %p178
      %p185 = scmp.eq.s32.totalorder %s15, 1
      %p186 = por %p184, %p185
      %p187 = scmp.ne.s32.totalorder %s179, %s182
      %p188 = scmp.eq.s32.totalorder %s15, 0
      %p189 = por %p187, %p188
      %p190 = scmp.ne.s32.totalorder %s179, %s182
      %p191 = scmp.eq.s32.totalorder %s20, 1
      %p192 = por %p190, %p191
      %p193 = scmp.ne.s32.totalorder %s182, %s183
      %p194 = scmp.eq.s32.totalorder %s20, 0
      %p195 = por %p193, %p194
      %p196 = scmp.ne.s32.totalorder %s182, %s183
      %p197 = scmp.eq.s32.totalorder %s21, 1
      %p198 = por %p196, %p197
      %p200 = scmp.ne.s32.totalorder %s183, %s199
      %p201 = scmp.eq.s32.totalorder %s21, 0
      %p202 = por %p200, %p201
      %p203 = scmp.le.s32.totalorder 1, %s15
      %p204 = scmp.lt.s32.totalorder %s15, 3
      %p205 = pnand %p203, %p204
      %p206 = pneg %p205
      // Predicated region
      $region9: #{tpu_custom_call.1} parent=5 // pred_check
        _
      $region10: #{tpu_custom_call.1} parent=5 // pred_check_branch
        %208 = sbr.rel (%p205) target = $region12
      $region11: #{tpu_custom_call.1} parent=5 // pred_region
        %s209 = ssub.s32 %s15, 1
        // Predicated region
        $region13: #{tpu_custom_call.1} parent=11 // pred_check
          %p210 = pneg %p104
        $region14: #{tpu_custom_call.1} parent=11 // pred_check_branch
          %212 = sbr.rel (%p210) target = $region16
        $region15: #{tpu_custom_call.1} parent=11 // pred_region
          _
        $region16: #{tpu_custom_call.1} parent=11 // pred_fallthru
          _
        // Predicated region
        $region17: #{tpu_custom_call.1} parent=11 // pred_check
          %p213 = pneg %p125
        $region18: #{tpu_custom_call.1} parent=11 // pred_check_branch
          %215 = sbr.rel (%p213) target = $region20
        $region19: #{tpu_custom_call.1} parent=11 // pred_region
          _
        $region20: #{tpu_custom_call.1} parent=11 // pred_fallthru
          _
        // Predicated region
        $region21: #{tpu_custom_call.1} parent=11 // pred_check
          %p216 = pneg %p146
        $region22: #{tpu_custom_call.1} parent=11 // pred_check_branch
          %218 = sbr.rel (%p216) target = $region24
        $region23: #{tpu_custom_call.1} parent=11 // pred_region
          _
        $region24: #{tpu_custom_call.1} parent=11 // pred_fallthru
          _
        // Predicated region
        $region25: #{tpu_custom_call.1} parent=11 // pred_check
          %p219 = pneg %p167
        $region26: #{tpu_custom_call.1} parent=11 // pred_check_branch
          %221 = sbr.rel (%p219) target = $region28
        $region27: #{tpu_custom_call.1} parent=11 // pred_region
          _
        $region28: #{tpu_custom_call.1} parent=11 // pred_fallthru
          _
      $region12: #{tpu_custom_call.1} parent=5 // pred_fallthru
        _
      %p222 = scmp.lt.s32.totalorder %s15, 2
      // Predicated region
      $region29: #{tpu_custom_call.1} parent=5 // pred_check
        %p223 = pneg %p222
      $region30: #{tpu_custom_call.1} parent=5 // pred_check_branch
        %225 = sbr.rel (%p223) target = $region32
      $region31: #{tpu_custom_call.1} parent=5 // pred_region
        // Predicated region
        $region33: #{tpu_custom_call.1} parent=31 // pred_check
          %p226 = pneg %p49
        $region34: #{tpu_custom_call.1} parent=31 // pred_check_branch
          %228 = sbr.rel (%p226) target = $region36
        $region35: #{tpu_custom_call.1} parent=31 // pred_region
          %p229 = scmp.lt.s32.totalorder %s22, 1
          %s230 = scalar_select %p229, %s22, 1
          %p231 = scmp.lt.s32.totalorder %s23, 0
          %s232 = scalar_select %p231, %s23, 0
          %s233 = sadd.s32 %s232, %s230
          %s234 = smul.addr %s233, 4
          %s235 = scalar_lea.vmem %s0, %s234
        $region36: #{tpu_custom_call.1} parent=31 // pred_fallthru
          _
        // Predicated region
        $region37: #{tpu_custom_call.1} parent=31 // pred_check
          %p236 = pneg %p77
        $region38: #{tpu_custom_call.1} parent=31 // pred_check_branch
          %238 = sbr.rel (%p236) target = $region40
        $region39: #{tpu_custom_call.1} parent=31 // pred_region
          %p239 = scmp.lt.s32.totalorder %s23, 0
          %s240 = scalar_select %p239, %s23, 0
          %p241 = scmp.lt.s32.totalorder %s22, 1
          %s242 = scalar_select %p241, %s22, 1
          %s243 = smul.addr %s240, 2
          %s244 = sadd.s32 %s242, %s243
          %s245 = smul.addr %s244, 4
          %s246 = scalar_lea.vmem %s1, %s245
        $region40: #{tpu_custom_call.1} parent=31 // pred_fallthru
          _
      $region32: #{tpu_custom_call.1} parent=5 // pred_fallthru
        _
      %p247 = scmp.le.s32.totalorder 1, %s15
      %p248 = scmp.lt.s32.totalorder %s15, 3
      %p249 = pnand %p247, %p248
      %p250 = pneg %p249
      // Predicated region
      $region41: #{tpu_custom_call.1} parent=5 // pred_check
        _
      $region42: #{tpu_custom_call.1} parent=5 // pred_check_branch
        %252 = sbr.rel (%p249) target = $region44
      $region43: #{tpu_custom_call.1} parent=5 // pred_region
        %s253 = ssub.s32 %s15, 1
        %p254 = scmp.lt.s32.totalorder %s24, 1
        %s255 = scalar_select %p254, %s24, 1
        %p256 = scmp.lt.s32.totalorder %s25, 0
        %s257 = scalar_select %p256, %s25, 0
        %s258 = sadd.s32 %s257, %s255
        %s259 = smul.addr %s258, 4
        %s260 = scalar_lea.vmem %s0, %s259
        %p261 = pneg %p55
        %p262 = pneg %p52
        %p263 = scmp.lt.s32.totalorder %s25, 0
        %s264 = scalar_select %p263, %s25, 0
        %p265 = scmp.lt.s32.totalorder %s24, 1
        %s266 = scalar_select %p265, %s24, 1
        %s267 = smul.addr %s264, 2
        %s268 = sadd.s32 %s266, %s267
        %s269 = smul.addr %s268, 4
        %s270 = scalar_lea.vmem %s1, %s269
        %p271 = pneg %p83
        %p272 = pneg %p80
        %p273 = pneg %p104
        %p274 = pneg %p101
        %p275 = pneg %p125
        %p276 = pneg %p122
        %p277 = pneg %p146
        %p278 = pneg %p143
        %p279 = pneg %p167
        %p280 = pneg %p164
        %p281 = pneg %p195
        %p282 = pneg %p192
        %s283 = sand.u32 %s182, 1
        %s284 = scalar_lea.sflag [#allocation3], %s283
        %s285 = sand.u32 %s182, 1
        %s286 = smul.addr %s285, 4
        %s287 = scalar_lea.vmem [#allocation2], %s286
        %p288 = scmp.lt.s32.totalorder %s24, 1
        %s289 = scalar_select %p288, %s24, 1
        %p290 = scmp.lt.s32.totalorder %s25, 0
        %s291 = scalar_select %p290, %s25, 0
        %s292 = sadd.s32 %s291, %s289
        %s293 = smul.addr %s292, 4
        %s294 = scalar_lea.vmem %s0, %s293
        %p295 = scmp.lt.s32.totalorder %s25, 0
        %s296 = scalar_select %p295, %s25, 0
        %p297 = scmp.lt.s32.totalorder %s24, 1
        %s298 = scalar_select %p297, %s24, 1
        %s299 = smul.addr %s296, 2
        %s300 = sadd.s32 %s298, %s299
        %s301 = smul.addr %s300, 4
        %s302 = scalar_lea.vmem %s1, %s301
        %s304 = smul.u32 %s25, 16
        %s305 = ssub.s32 %s304, 4
        %v306 = vld [vmem:[%s302] sm:$0xf]
        %v307 = vld [vmem:[%s294] sm:$0xf]
        %309 = vrot.lane.b32.xlu0 %v307, 4
        %v310 = vpop.permute.xlu0 %309
        %313 = vrot.lane.b32.xlu0 %v306, 16
        %v314 = vpop.permute.xlu0 %313
        %vm316 = vcmask 31744
        %v317 = vsel %vm316, %v306, %v310
        %vm318 = vcmask 162816
        %v319 = vsel %vm318, %v317, %v314
        %v320 = vlaneseq
        %v321 = vand.u32 %v320, 127
        %v322 = vstv %s305
        %v323 = vadd.s32 %v321, %v322
        %vm324 = vcmp.ge.s32.totalorder %v323, 0
        %vm325 = vcmp.lt.s32.totalorder %v323, 16
        %vm326 = vmand %vm324, %vm325
        %v327 = vsel %vm326, 1, 0
        %vm328 = vcmp.eq.s32.totalorder %v327, 1
        %v329 = vsel %vm328, %v319, 0.0
        %v330 = vld [vmem:[%s4] sm:$0xf]
        %v331 = vld [vmem:[%s5] sm:$0xf]
        %333 = vset.pattern.permute.xlu0 0
        %334 = vperm.xlu0 %333, %v330
        %v335 = vpop.permute.xlu0 %334
        %v337 = vmul.f32 %v335, %v329
        %v338 = vand.u32 2147483647, %v337
        %vm339 = vcmp.le.f32.partialorder %v338, 0.7853982
        %vm340 = vcmp.lt.s32.totalorder %v337, 0
        %v341 = vand.u32 %v337, 2139095040
        %v342 = vshrl.u32 %v341, 23
        %v343 = vsub.s32 %v342, 127
        %v344 = vand.u32 2147483647, %v337
        %v345 = vand.u32 %v344, 8388607
        %v346 = vor.u32 %v345, 8388608
        %v347 = vsub.s32 0, %v346
        %v348 = vadd.s32 %v343, 1
        %vm349 = vcmp.gt.s32.totalorder %v348, 0
        %v350 = vsel %vm349, %v348, 0
        %v351 = vshrl.u32 %v350, 5
        %v352 = vand.u32 %v350, 31
        %v353 = vsub.s32 32, %v352
        %v354 = vshrl.u32 683565275, %v353
        %v355 = vshll.u32 683565275, %v352
        %v356 = vshrl.u32 2475754826, %v353
        %v357 = vor.u32 %v355, %v356
        %v358 = vshll.u32 2475754826, %v352
        %v359 = vshrl.u32 2131351028, %v353
        %v360 = vor.u32 %v358, %v359
        %v361 = vshll.u32 2131351028, %v352
        %v362 = vshrl.u32 2102212464, %v353
        %v363 = vor.u32 %v361, %v362
        %v364 = vshll.u32 2102212464, %v352
        %v365 = vshrl.u32 920167782, %v353
        %v366 = vor.u32 %v364, %v365
        %v367 = vshll.u32 920167782, %v352
        %v368 = vshrl.u32 1326507024, %v353
        %v369 = vor.u32 %v367, %v368
        %vm370 = vcmp.lt.s32.totalorder %v351, 1
        %vm371 = vcmp.lt.s32.totalorder %v351, 2
        %vm372 = vcmp.lt.s32.totalorder %v351, 3
        %vm373 = vcmp.lt.s32.totalorder %v351, 4
        %v374 = vsel %vm370, %v354, %v357
        %v375 = vsel %vm373, %v363, 2102212464
        %v376 = vsel %vm372, %v360, %v375
        %v377 = vsel %vm371, %v374, %v376
        %v378 = vsel %vm370, %v357, %v360
        %v379 = vsel %vm373, %v366, 920167782
        %v380 = vsel %vm372, %v363, %v379
        %v381 = vsel %vm371, %v378, %v380
        %v382 = vsel %vm370, %v360, %v363
        %v383 = vsel %vm373, %v369, 1326507024
        %v384 = vsel %vm372, %v366, %v383
        %v385 = vsel %vm371, %v382, %v384
        %v386 = vshll.u32 %v346, 8
        %v387 = vmul.u32.u64.compose %v386, %v385
        %v388 = vextract.low.u32 %v387
        %v389 = vextract.high.u32 %v387
        %v390 = vmul.u32.u64.compose %v386, %v381
        %v391 = vextract.low.u32 %v390
        %v392 = vextract.high.u32 %v390
        %v393 = vmul.u32 %v386, %v377
        %v394 = vadd.s32 %v389, %v391
        %vm395 = vc.u32 %v389, %v391
        %v396 = vadd.s32 %v392, 1
        %v397 = vsel %vm395, %v396, %v392
        %v398 = vadd.s32 %v393, %v397
        %v399 = vadd.s32 %v398, 536870912
        %v400 = vshrl.u32 %v399, 30
        %v401 = vshll.u32 %v400, 30
        %v402 = vsub.s32 %v398, %v401
        %vm403 = vcmp.lt.s32.totalorder %v402, 0
        %v404 = vsub.s32 0, %v402
        %v405 = vsel %vm403, %v404, %v402
        %v406 = vclz %v405
        %v407 = vsub.s32 %v406, 2
        %vm408 = vcmp.gt.s32.totalorder 0, %v407
        %v409 = vsel %vm408, 0, %v407
        %v410 = vsub.s32 32, %v409
        %v411 = vshll.u32 %v402, %v409
        %v412 = vshrl.u32 %v394, %v410
        %v413 = vor.u32 %v411, %v412
        %v414 = vsub.s32 4294967266, %v409
        %v415 = vadd.s32 %v414, 127
        %v416 = vshll.u32 %v415, 23
        %v417 = vor.u32 4788187, %v416
        %v418 = vand.u32 2147483647, %v417
        %v420 = vcvt.s32.f32 %v413
        %v421 = vmul.f32 %v420, %v418
        %v422 = vxor.u32 %v421, 2147483648
        %v423 = vsel %vm340, %v422, %v421
        %v424 = vsub.s32 4, %v400
        %v425 = vsel %vm340, %v424, %v400
        %v426 = vsel %vm339, %v337, %v423
        %v427 = vsel %vm339, 0, %v425
        %v428 = vcosq.f32.pop %v426
        %v429 = vsinq.f32.pop %v426
        %vm430 = vweird.f32 %v337
        %v431 = vadd.s32 %v427, 3
        %v432 = vand.u32 %v431, 3
        %vm433 = vcmp.lt.s32.totalorder %v432, 2
        %vm434 = vcmp.eq.s32.totalorder %v432, 0
        %v435 = vxor.u32 %v429, 2147483648
        %v436 = vsel %vm434, %v428, %v435
        %vm437 = vcmp.eq.s32.totalorder %v432, 2
        %v438 = vxor.u32 %v428, 2147483648
        %v439 = vsel %vm437, %v438, %v429
        %v440 = vsel %vm433, %v436, %v439
        %v441 = vsel %vm430, nan, %v440
        %v442 = vmul.f32 %v441, %v441
        %444 = vset.pattern.permute.xlu0 0
        %445 = vperm.xlu0 %444, %v331
        %v446 = vpop.permute.xlu0 %445
        %v448 = vmul.f32 %v446, %v442
        %v449 = vadd.f32 %v329, %v448
        %v450 = vpack.c.bf16 %v449, %v449
        %v452 = vrot.slane %v450, 6
        %453 = vrot.lane.b32.xlu0 %v452, 127
        %v454 = vpop.permute.xlu0 %453
        %v455 = vrot.slane %v450, 4
        %456 = vrot.lane.b32.xlu0 %v455, 126
        %v457 = vpop.permute.xlu0 %456
        %vm458 = vcmask 1041408
        %v461 = vsel %vm458, %v450, %v454
        %vm462 = vcmask 1043456
        %v464 = vsel %vm462, %v461, %v457
        %v465 = vld [vmem:[%s2] sm:$0x3]
        %v466 = vld [vmem:[%s3] sm:$0xf]
        %468 = vset.pattern.permute.xlu0 0
        %469 = vperm.xlu0 %468, %v466
        %v470 = vpop.permute.xlu0 %469
        %vm472 = vcmask 97280
        %v474 = vsel %vm472, %v465, 0
        %vm476 = vcmask 1045504
        %v477 = vsel %vm476, %v464, 0
        %479 = vmatprep.subr.bf16.mxu0 0
        %480 = vmatpush1.bf16.msra.mxu0 0
        %481 = vmatprep.subr.bf16.mxu0 0
        %482 = vmatpush1.bf16.msra.mxu0 0
        %483 = vmatprep.subr.bf16.mxu0 0
        %484 = vmatpush1.bf16.msra.mxu0 0
        %485 = vmatprep.subr.bf16.mxu0 0
        %486 = vmatpush1.bf16.msra.mxu0 0
        %487 = vmatprep.subr.bf16.mxu0 0
        %488 = vmatpush1.bf16.msra.mxu0 0
        %489 = vmatprep.subr.bf16.mxu0 0
        %490 = vmatpush1.bf16.msra.mxu0 0
        %491 = vmatprep.subr.bf16.mxu0 0
        %492 = vmatpush1.bf16.msra.mxu0 0
        %493 = vmatprep.subr.bf16.mxu0 0
        %494 = vmatpush1.bf16.msra.mxu0 %v477
        %495 = vmatprep.subr.bf16.mxu0 0
        %496 = vmatpush2.bf16.msra.mxu0 0
        %497 = vmatprep.subr.bf16.mxu0 0
        %498 = vmatpush2.bf16.msra.mxu0 0
        %499 = vmatprep.subr.bf16.mxu0 0
        %500 = vmatpush2.bf16.msra.mxu0 0
        %501 = vmatprep.subr.bf16.mxu0 0
        %502 = vmatpush2.bf16.msra.mxu0 0
        %503 = vmatprep.subr.bf16.mxu0 0
        %504 = vmatpush2.bf16.msra.mxu0 0
        %505 = vmatprep.subr.bf16.mxu0 0
        %506 = vmatpush2.bf16.msra.mxu0 0
        %507 = vmatprep.subr.bf16.mxu0 0
        %508 = vmatpush2.bf16.msra.mxu0 0
        %509 = vmatprep.subr.bf16.mxu0 0
        %510 = vmatpush2.bf16.msra.mxu0 0
        %511 = vmatprep.mubr.bf16.mxu0 0
        %512 = vmatmul.mubr.bf16.gmra.mxu0 %v474
        %v513 = vpop.f32.mrf.mxu0
        %v514 = vadd.f32 %v470, %v513
        %v515 = vpop.f32.mrf.mxu0
        %v516 = vpop.f32.mrf.mxu0
        %v517 = vpop.f32.mrf.mxu0
        %518 = vdwg.mxu0
        %520 = vrot.lane.b32.xlu0 %v329, 127
        %v521 = vpop.permute.xlu0 %520
        %v523 = vadd.f32 %v514, %v521
        %525 = vrot.lane.b32.xlu0 %v523, 1
        %v526 = vpop.permute.xlu0 %525
        %v528 = vsel %vm328, %v526, 0.0
        %s529 = scalar_lea.vmem %s4, 4
        %v530 = vld [vmem:[%s529] sm:$0xf]
        %s531 = scalar_lea.vmem %s5, 4
        %v532 = vld [vmem:[%s531] sm:$0xf]
        %534 = vset.pattern.permute.xlu0 0
        %535 = vperm.xlu0 %534, %v530
        %v536 = vpop.permute.xlu0 %535
        %v538 = vmul.f32 %v536, %v528
        %v539 = vand.u32 2147483647, %v538
        %vm540 = vcmp.le.f32.partialorder %v539, 0.7853982
        %vm541 = vcmp.lt.s32.totalorder %v538, 0
        %v542 = vand.u32 %v538, 2139095040
        %v543 = vshrl.u32 %v542, 23
        %v544 = vsub.s32 %v543, 127
        %v545 = vand.u32 2147483647, %v538
        %v546 = vand.u32 %v545, 8388607
        %v547 = vor.u32 %v546, 8388608
        %v548 = vsub.s32 0, %v547
        %v549 = vadd.s32 %v544, 1
        %vm550 = vcmp.gt.s32.totalorder %v549, 0
        %v551 = vsel %vm550, %v549, 0
        %v552 = vshrl.u32 %v551, 5
        %v553 = vand.u32 %v551, 31
        %v554 = vsub.s32 32, %v553
        %v555 = vshrl.u32 683565275, %v554
        %v556 = vshll.u32 683565275, %v553
        %v557 = vshrl.u32 2475754826, %v554
        %v558 = vor.u32 %v556, %v557
        %v559 = vshll.u32 2475754826, %v553
        %v560 = vshrl.u32 2131351028, %v554
        %v561 = vor.u32 %v559, %v560
        %v562 = vshll.u32 2131351028, %v553
        %v563 = vshrl.u32 2102212464, %v554
        %v564 = vor.u32 %v562, %v563
        %v565 = vshll.u32 2102212464, %v553
        %v566 = vshrl.u32 920167782, %v554
        %v567 = vor.u32 %v565, %v566
        %v568 = vshll.u32 920167782, %v553
        %v569 = vshrl.u32 1326507024, %v554
        %v570 = vor.u32 %v568, %v569
        %vm571 = vcmp.lt.s32.totalorder %v552, 1
        %vm572 = vcmp.lt.s32.totalorder %v552, 2
        %vm573 = vcmp.lt.s32.totalorder %v552, 3
        %vm574 = vcmp.lt.s32.totalorder %v552, 4
        %v575 = vsel %vm571, %v555, %v558
        %v576 = vsel %vm574, %v564, 2102212464
        %v577 = vsel %vm573, %v561, %v576
        %v578 = vsel %vm572, %v575, %v577
        %v579 = vsel %vm571, %v558, %v561
        %v580 = vsel %vm574, %v567, 920167782
        %v581 = vsel %vm573, %v564, %v580
        %v582 = vsel %vm572, %v579, %v581
        %v583 = vsel %vm571, %v561, %v564
        %v584 = vsel %vm574, %v570, 1326507024
        %v585 = vsel %vm573, %v567, %v584
        %v586 = vsel %vm572, %v583, %v585
        %v587 = vshll.u32 %v547, 8
        %v588 = vmul.u32.u64.compose %v587, %v586
        %v589 = vextract.low.u32 %v588
        %v590 = vextract.high.u32 %v588
        %v591 = vmul.u32.u64.compose %v587, %v582
        %v592 = vextract.low.u32 %v591
        %v593 = vextract.high.u32 %v591
        %v594 = vmul.u32 %v587, %v578
        %v595 = vadd.s32 %v590, %v592
        %vm596 = vc.u32 %v590, %v592
        %v597 = vadd.s32 %v593, 1
        %v598 = vsel %vm596, %v597, %v593
        %v599 = vadd.s32 %v594, %v598
        %v600 = vadd.s32 %v599, 536870912
        %v601 = vshrl.u32 %v600, 30
        %v602 = vshll.u32 %v601, 30
        %v603 = vsub.s32 %v599, %v602
        %vm604 = vcmp.lt.s32.totalorder %v603, 0
        %v605 = vsub.s32 0, %v603
        %v606 = vsel %vm604, %v605, %v603
        %v607 = vclz %v606
        %v608 = vsub.s32 %v607, 2
        %vm609 = vcmp.gt.s32.totalorder 0, %v608
        %v610 = vsel %vm609, 0, %v608
        %v611 = vsub.s32 32, %v610
        %v612 = vshll.u32 %v603, %v610
        %v613 = vshrl.u32 %v595, %v611
        %v614 = vor.u32 %v612, %v613
        %v615 = vsub.s32 4294967266, %v610
        %v616 = vadd.s32 %v615, 127
        %v617 = vshll.u32 %v616, 23
        %v618 = vor.u32 4788187, %v617
        %v619 = vand.u32 2147483647, %v618
        %v621 = vcvt.s32.f32 %v614
        %v622 = vmul.f32 %v621, %v619
        %v623 = vxor.u32 %v622, 2147483648
        %v624 = vsel %vm541, %v623, %v622
        %v625 = vsub.s32 4, %v601
        %v626 = vsel %vm541, %v625, %v601
        %v627 = vsel %vm540, %v538, %v624
        %v628 = vsel %vm540, 0, %v626
        %v629 = vcosq.f32.pop %v627
        %v630 = vsinq.f32.pop %v627
        %vm631 = vweird.f32 %v538
        %v632 = vadd.s32 %v628, 3
        %v633 = vand.u32 %v632, 3
        %vm634 = vcmp.lt.s32.totalorder %v633, 2
        %vm635 = vcmp.eq.s32.totalorder %v633, 0
        %v636 = vxor.u32 %v630, 2147483648
        %v637 = vsel %vm635, %v629, %v636
        %vm638 = vcmp.eq.s32.totalorder %v633, 2
        %v639 = vxor.u32 %v629, 2147483648
        %v640 = vsel %vm638, %v639, %v630
        %v641 = vsel %vm634, %v637, %v640
        %v642 = vsel %vm631, nan, %v641
        %v643 = vmul.f32 %v642, %v642
        %645 = vset.pattern.permute.xlu0 0
        %646 = vperm.xlu0 %645, %v532
        %v647 = vpop.permute.xlu0 %646
        %v649 = vmul.f32 %v647, %v643
        %v650 = vadd.f32 %v528, %v649
        %v651 = vpack.c.bf16 %v650, %v650
        %v653 = vrot.slane %v651, 6
        %654 = vrot.lane.b32.xlu0 %v653, 125
        %v655 = vpop.permute.xlu0 %654
        %v656 = vrot.slane %v651, 4
        %657 = vrot.lane.b32.xlu0 %v656, 122
        %v658 = vpop.permute.xlu0 %657
        %v661 = vsel %vm458, %v651, %v655
        %v663 = vsel %vm462, %v661, %v658
        %s664 = scalar_lea.vmem %s2, 2
        %v665 = vld [vmem:[%s664] sm:$0x3]
        %s666 = scalar_lea.vmem %s3, 4
        %v667 = vld [vmem:[%s666] sm:$0xf]
        %669 = vset.pattern.permute.xlu0 0
        %670 = vperm.xlu0 %669, %v667
        %v671 = vpop.permute.xlu0 %670
        %674 = vrot.lane.b32.xlu0 %v663, 127
        %v675 = vpop.permute.xlu0 %674
        %v677 = vsel %vm472, %v665, 0
        %v680 = vsel %vm476, %v675, 0
        %682 = vmatprep.subr.bf16.mxu0 0
        %683 = vmatpush1.bf16.msra.mxu0 0
        %684 = vmatprep.subr.bf16.mxu0 0
        %685 = vmatpush1.bf16.msra.mxu0 0
        %686 = vmatprep.subr.bf16.mxu0 0
        %687 = vmatpush1.bf16.msra.mxu0 0
        %688 = vmatprep.subr.bf16.mxu0 0
        %689 = vmatpush1.bf16.msra.mxu0 0
        %690 = vmatprep.subr.bf16.mxu0 0
        %691 = vmatpush1.bf16.msra.mxu0 0
        %692 = vmatprep.subr.bf16.mxu0 0
        %693 = vmatpush1.bf16.msra.mxu0 0
        %694 = vmatprep.subr.bf16.mxu0 0
        %695 = vmatpush1.bf16.msra.mxu0 0
        %696 = vmatprep.subr.bf16.mxu0 0
        %697 = vmatpush1.bf16.msra.mxu0 %v680
        %698 = vmatprep.subr.bf16.mxu0 0
        %699 = vmatpush2.bf16.msra.mxu0 0
        %700 = vmatprep.subr.bf16.mxu0 0
        %701 = vmatpush2.bf16.msra.mxu0 0
        %702 = vmatprep.subr.bf16.mxu0 0
        %703 = vmatpush2.bf16.msra.mxu0 0
        %704 = vmatprep.subr.bf16.mxu0 0
        %705 = vmatpush2.bf16.msra.mxu0 0
        %706 = vmatprep.subr.bf16.mxu0 0
        %707 = vmatpush2.bf16.msra.mxu0 0
        %708 = vmatprep.subr.bf16.mxu0 0
        %709 = vmatpush2.bf16.msra.mxu0 0
        %710 = vmatprep.subr.bf16.mxu0 0
        %711 = vmatpush2.bf16.msra.mxu0 0
        %712 = vmatprep.subr.bf16.mxu0 0
        %713 = vmatpush2.bf16.msra.mxu0 0
        %714 = vmatprep.mubr.bf16.mxu0 0
        %715 = vmatmul.mubr.bf16.gmra.mxu0 %v677
        %v716 = vpop.f32.mrf.mxu0
        %v717 = vadd.f32 %v671, %v716
        %v718 = vpop.f32.mrf.mxu0
        %v719 = vpop.f32.mrf.mxu0
        %v720 = vpop.f32.mrf.mxu0
        %721 = vdwg.mxu0
        %723 = vrot.lane.b32.xlu0 %v528, 124
        %v724 = vpop.permute.xlu0 %723
        %v726 = vadd.f32 %v717, %v724
        %vm727 = vcmask 125952
        %728 = vst.msk [vmem:[%s287] sm:$0xf] %vm727, %v726
        %s729 = sand.u32 %s182, 1
        %s730 = scalar_lea.sflag [#allocation3], %s729
        %s731 = sand.u32 %s182, 1
        %s732 = smul.addr %s731, 4
        %s733 = scalar_lea.vmem [#allocation2], %s732
        // Predicated region
        $region45: #{tpu_custom_call.1} parent=43 // pred_check
          %p734 = pneg %p192
        $region46: #{tpu_custom_call.1} parent=43 // pred_check_branch
          %736 = sbr.rel (%p734) target = $region48
        $region47: #{tpu_custom_call.1} parent=43 // pred_region
          %s738 = ssub.s32 64, 64
          %739 = vsyncadd %s730, %s738
          %s740 = sadd.s32 %s25, %s24
          %s741 = smul.addr %s740, 64
          %s742 = scalar_lea.hbm %s6, %s741
          %s744 = sshll.u32 %s733, 4
          %s745 = int_to_ptr.vmem [resolvable:$true] %s744
          %747 = dma.vmem_to_hbm [thread:$0]  %s745, 64, %s742, %s730
        $region48: #{tpu_custom_call.1} parent=43 // pred_fallthru
          _
      $region44: #{tpu_custom_call.1} parent=5 // pred_fallthru
        _
      %p748 = scmp.le.s32.totalorder 2, %s15
      // Predicated region
      $region49: #{tpu_custom_call.1} parent=5 // pred_check
        %p749 = pneg %p748
      $region50: #{tpu_custom_call.1} parent=5 // pred_check_branch
        %751 = sbr.rel (%p749) target = $region52
      $region51: #{tpu_custom_call.1} parent=5 // pred_region
        %s752 = ssub.s32 %s15, 2
        // Predicated region
        $region53: #{tpu_custom_call.1} parent=51 // pred_check
          %p753 = pneg %p198
        $region54: #{tpu_custom_call.1} parent=51 // pred_check_branch
          %755 = sbr.rel (%p753) target = $region56
        $region55: #{tpu_custom_call.1} parent=51 // pred_region
          %s756 = sand.u32 %s183, 1
          %s757 = scalar_lea.sflag [#allocation3], %s756
          %s758 = sand.u32 %s183, 1
          %s759 = smul.addr %s758, 4
          %s760 = scalar_lea.vmem [#allocation2], %s759
          %761 = dma.done %s757, 64
        $region56: #{tpu_custom_call.1} parent=51 // pred_fallthru
          _
      $region52: #{tpu_custom_call.1} parent=5 // pred_fallthru
        _
    $region6: #{tpu_custom_call.1} parent=1 // loop_footer
      %s19 = sadd.s32 1, %s15
    $region7: #{tpu_custom_call.1} parent=1 // loop_footer_branch
      %14 = sbr.rel target = $region3
    $region8: #{tpu_custom_call.1} parent=1 // loop_exit
      _
    %762 = vsyncpa [#allocation3], 1
    %s763 = scalar_lea.sflag [#allocation3], 1
    %764 = vsyncpa %s763, 1

</llo_original>
